<compile_context>
chip_gen: v5e
topology: v5e:2x2
jax: 0.10.0
libtpu: 0.0.40
codegen_flags: <defaults>
</compile_context>

<pallas_src>
import functools

import jax
import jax.numpy as jnp
from jax.experimental import pallas as pl
from jax.experimental.pallas import tpu as pltpu

_LANE = 128
_SUBLANE = 8


def _round_up(n, m):
    return ((n + m - 1) // m) * m


def _mlp_kernel(x_ref, w1_ref, b1_ref, w2_ref, b2_ref, o_ref):
    # x_ref : (TB, D)   with D tiny (=2), full-extent block (no padding)
    # w1_ref: (D, Hp)   Hp = 128 (pre-padded once at init)
    # b1_ref: (1, Hp)
    # w2_ref: (Hp, Op)  Op = 128
    # b2_ref: (1, Op)
    # o_ref : (TB, Op)  lane-dense output block -> unmasked full-width stores
    x = x_ref[...]
    w1 = w1_ref[...]
    d = x.shape[1]  # static (from block shape)

    # Layer 1 on the VPU: K = d = 2 would use <2% of the MXU and pay push/pop
    # latency, so unroll it as an outer-product sum (VALU has plenty of slack).
    h = x[:, 0:1] * w1[0:1, :]
    for k in range(1, d):
        h = h + x[:, k : k + 1] * w1[k : k + 1, :]
    h = h + b1_ref[...]           # f32 bias add
    h = jnp.maximum(h, 0.0)       # f32 ReLU (safe on v5e: no bf16 VPU path needed)

    # Layer 2 on the MXU, f32 accumulate. Padded hidden lanes are exactly zero
    # (relu(0 + 0) = 0) and their rows of w2 are zero, so padding is exact.
    y = jnp.dot(h, w2_ref[...], preferred_element_type=jnp.float32)
    y = y + b2_ref[...]
    o_ref[...] = y.astype(o_ref.dtype)


def prepare_params(w1, b1, w2, b2):
    """One-time padding of weights/biases to lane-dense (128) hidden/output dims.

    Hoisted out of the per-call path: do this once at init and reuse the padded
    arrays for every forward call.
    """
    d, h = w1.shape
    o = w2.shape[1]
    hp = _round_up(h, _LANE)
    op = _round_up(o, _LANE)
    w1p = jnp.zeros((d, hp), jnp.float32).at[:, :h].set(w1)
    b1p = jnp.zeros((1, hp), jnp.float32).at[0, :h].set(b1)
    w2p = jnp.zeros((hp, op), jnp.float32).at[:h, :o].set(w2)
    b2p = jnp.zeros((1, op), jnp.float32).at[0, :o].set(b2)
    return w1p, b1p, w2p, b2p


@functools.partial(jax.jit, static_argnames=("out_dim",))
def simple_nn_forward(x, w1p, b1p, w2p, b2p, *, out_dim):
    """Forward pass of SimpleNN.

    x   : (B, input_dim) float32 (unpadded)
    w1p : (input_dim, Hp), b1p: (1, Hp)     -- pre-padded via prepare_params
    w2p : (Hp, Op),        b2p: (1, Op)
    returns (B, out_dim) float32
    """
    B, D = x.shape
    Hp = w1p.shape[1]
    Op = w2p.shape[1]

    # Batch tile: big enough for good DMA pipelining on large B, bounded so
    # double-buffered tiles stay tiny in VMEM (TB=512, Hp=Op=128 f32 is well
    # under the 32 MiB scoped limit even on v7x's 64 MiB parts).
    TB = 512 if B >= 512 else _round_up(B, _SUBLANE)
    Bp = _round_up(B, TB)

    # Only the (cheap, 2-column) batch padding is ever done per call, and only
    # when B isn't already a tile multiple.
    xp = x if Bp == B else jnp.zeros((Bp, D), x.dtype).at[:B, :].set(x)

    out_padded = pl.pallas_call(
        _mlp_kernel,
        out_shape=jax.ShapeDtypeStruct((Bp, Op), jnp.float32),
        grid=(Bp // TB,),
        in_specs=[
            # x: tiled over batch; last dim D=2 is full-extent (legal, no padding).
            pl.BlockSpec((TB, D), lambda i: (i, 0)),
            # Weights/biases: constant index_map -> DMA'd once, VMEM-resident.
            pl.BlockSpec((D, Hp), lambda i: (0, 0)),
            pl.BlockSpec((1, Hp), lambda i: (0, 0)),
            pl.BlockSpec((Hp, Op), lambda i: (0, 0)),
            pl.BlockSpec((1, Op), lambda i: (0, 0)),
        ],
        out_specs=pl.BlockSpec((TB, Op), lambda i: (i, 0)),
        compiler_params=pltpu.CompilerParams(
            # Batch axis is embarrassingly parallel -> megacore sharding on v7x.
            dimension_semantics=("parallel",),
        ),
    )(xp, w1p, b1p, w2p, b2p)

    # Slice only the lane dim when no batch padding was added (no row copy).
    if Bp == B:
        return out_padded[:, :out_dim]
    return out_padded[:B, :out_dim]


def init_params(key, input_dim=2, hidden_dim=10, output_dim=2):
    """Deterministic init mimicking PyTorch nn.Linear default (uniform +/- 1/sqrt(fan_in))."""
    k1, k2, k3, k4 = jax.random.split(key, 4)
    lim1 = 1.0 / jnp.sqrt(jnp.float32(input_dim))
    lim2 = 1.0 / jnp.sqrt(jnp.float32(hidden_dim))
    w1 = jax.random.uniform(k1, (input_dim, hidden_dim), jnp.float32, -lim1, lim1)
    b1 = jax.random.uniform(k2, (hidden_dim,), jnp.float32, -lim1, lim1)
    w2 = jax.random.uniform(k3, (hidden_dim, output_dim), jnp.float32, -lim2, lim2)
    b2 = jax.random.uniform(k4, (output_dim,), jnp.float32, -lim2, lim2)
    return w1, b1, w2, b2


if __name__ == "__main__":
    key = jax.random.PRNGKey(0)
    k_x, k_p = jax.random.split(key)

    batch, input_dim, hidden_dim, output_dim = 8, 2, 10, 2
    x = jax.random.normal(k_x, (batch, input_dim), jnp.float32)
    w1, b1, w2, b2 = init_params(k_p, input_dim, hidden_dim, output_dim)

    # One-time weight padding (hoisted out of the per-call path).
    w1p, b1p, w2p, b2p = prepare_params(w1, b1, w2, b2)

    out = simple_nn_forward(x, w1p, b1p, w2p, b2p, out_dim=output_dim)
    out = jax.block_until_ready(out)

    # Pure-JAX reference check.
    ref = jnp.maximum(x @ w1 + b1, 0.0) @ w2 + b2
    assert out.shape == (batch, output_dim)
    assert jnp.allclose(out, ref, atol=1e-5, rtol=1e-5)

    print("KERNEL_OK")
</pallas_src>

<mosaic_0001>
module attributes {stable_mosaic.version = 11 : i64} {
  func.func @_mlp_kernel(%arg0: i32, %arg1: memref<8x2xf32, #tpu.memory_space<vmem>>, %arg2: memref<2x128xf32, #tpu.memory_space<vmem>>, %arg3: memref<1x128xf32, #tpu.memory_space<vmem>>, %arg4: memref<128x128xf32, #tpu.memory_space<vmem>>, %arg5: memref<1x128xf32, #tpu.memory_space<vmem>>, %arg6: memref<8x128xf32, #tpu.memory_space<vmem>>) attributes {dimension_semantics = [#tpu.dimension_semantics<parallel>], iteration_bounds = array<i64: 1>, scalar_prefetch = 0 : i64, scratch_operands = 0 : i64, tpu.core_type = #tpu.core_type<tc>, window_params = [{transform_indices = @transform_0, window_bounds = array<i64: 8, 2>}, {pipeline_mode = #tpu.pipeline_mode<synchronous>, transform_indices = @transform_1, window_bounds = array<i64: 2, 128>}, {pipeline_mode = #tpu.pipeline_mode<synchronous>, transform_indices = @transform_2, window_bounds = array<i64: 1, 128>}, {pipeline_mode = #tpu.pipeline_mode<synchronous>, transform_indices = @transform_3, window_bounds = array<i64: 128, 128>}, {pipeline_mode = #tpu.pipeline_mode<synchronous>, transform_indices = @transform_4, window_bounds = array<i64: 1, 128>}, {transform_indices = @transform_5, window_bounds = array<i64: 8, 128>}]} {
    %c0 = arith.constant 0 : index
    %c0_0 = arith.constant 0 : index
    %0 = vector.load %arg1[%c0, %c0_0] : memref<8x2xf32, #tpu.memory_space<vmem>>, vector<8x2xf32>
    %c0_1 = arith.constant 0 : index
    %c0_2 = arith.constant 0 : index
    %1 = vector.load %arg2[%c0_1, %c0_2] : memref<2x128xf32, #tpu.memory_space<vmem>>, vector<2x128xf32>
    %2 = vector.extract_strided_slice %0 {offsets = [0, 0], sizes = [8, 1], strides = [1, 1]} : vector<8x2xf32> to vector<8x1xf32>
    %3 = vector.extract_strided_slice %1 {offsets = [0, 0], sizes = [1, 128], strides = [1, 1]} : vector<2x128xf32> to vector<1x128xf32>
    %4 = vector.broadcast %2 : vector<8x1xf32> to vector<8x128xf32>
    %5 = vector.broadcast %3 : vector<1x128xf32> to vector<8x128xf32>
    %6 = arith.mulf %4, %5 : vector<8x128xf32>
    %7 = vector.extract_strided_slice %0 {offsets = [0, 1], sizes = [8, 1], strides = [1, 1]} : vector<8x2xf32> to vector<8x1xf32>
    %8 = vector.extract_strided_slice %1 {offsets = [1, 0], sizes = [1, 128], strides = [1, 1]} : vector<2x128xf32> to vector<1x128xf32>
    %9 = vector.broadcast %7 : vector<8x1xf32> to vector<8x128xf32>
    %10 = vector.broadcast %8 : vector<1x128xf32> to vector<8x128xf32>
    %11 = arith.mulf %9, %10 : vector<8x128xf32>
    %12 = arith.addf %6, %11 : vector<8x128xf32>
    %c0_3 = arith.constant 0 : index
    %c0_4 = arith.constant 0 : index
    %13 = vector.load %arg3[%c0_3, %c0_4] : memref<1x128xf32, #tpu.memory_space<vmem>>, vector<1x128xf32>
    %14 = vector.broadcast %13 : vector<1x128xf32> to vector<8x128xf32>
    %15 = arith.addf %12, %14 : vector<8x128xf32>
    %cst = arith.constant 0.000000e+00 : f32
    %16 = vector.broadcast %cst : f32 to vector<8x128xf32>
    %17 = arith.maximumf %15, %16 : vector<8x128xf32>
    %c0_5 = arith.constant 0 : index
    %c0_6 = arith.constant 0 : index
    %18 = vector.load %arg4[%c0_5, %c0_6] : memref<128x128xf32, #tpu.memory_space<vmem>>, vector<128x128xf32>
    %cst_7 = arith.constant dense<0.000000e+00> : vector<8x128xf32>
    %19 = tpu.matmul %17, %18, %cst_7 {dimension_numbers = #tpu.dot_dimension_numbers<[1], [0], [0], [1], [0, 0, 1, 1], [], []>} : vector<8x128xf32>, vector<128x128xf32>, vector<8x128xf32> -> vector<8x128xf32>
    %c0_8 = arith.constant 0 : index
    %c0_9 = arith.constant 0 : index
    %20 = vector.load %arg5[%c0_8, %c0_9] : memref<1x128xf32, #tpu.memory_space<vmem>>, vector<1x128xf32>
    %21 = vector.broadcast %20 : vector<1x128xf32> to vector<8x128xf32>
    %22 = arith.addf %19, %21 : vector<8x128xf32>
    %c0_10 = arith.constant 0 : index
    %c0_11 = arith.constant 0 : index
    %23 = vector.load %arg6[%c0_10, %c0_11] : memref<8x128xf32, #tpu.memory_space<vmem>>, vector<8x128xf32>
    tpu.vector_store %arg6[%c0_10, %c0_11], %22 {strides = array<i32>} : memref<8x128xf32, #tpu.memory_space<vmem>>, vector<8x128xf32>,
    return
  }
  func.func @transform_0(%arg0: i32) -> (i32, i32) {
    %c0_i32 = arith.constant 0 : i32
    %c0_i32_0 = arith.constant 0 : i32
    return %arg0, %c0_i32 : i32, i32
  }
  func.func @transform_1(%arg0: i32) -> (i32, i32) {
    %c0_i32 = arith.constant 0 : i32
    %c0_i32_0 = arith.constant 0 : i32
    %c0_i32_1 = arith.constant 0 : i32
    return %c0_i32, %c0_i32_0 : i32, i32
  }
  func.func @transform_2(%arg0: i32) -> (i32, i32) {
    %c0_i32 = arith.constant 0 : i32
    %c0_i32_0 = arith.constant 0 : i32
    %c0_i32_1 = arith.constant 0 : i32
    return %c0_i32, %c0_i32_0 : i32, i32
  }
  func.func @transform_3(%arg0: i32) -> (i32, i32) {
    %c0_i32 = arith.constant 0 : i32
    %c0_i32_0 = arith.constant 0 : i32
    %c0_i32_1 = arith.constant 0 : i32
    return %c0_i32, %c0_i32_0 : i32, i32
  }
  func.func @transform_4(%arg0: i32) -> (i32, i32) {
    %c0_i32 = arith.constant 0 : i32
    %c0_i32_0 = arith.constant 0 : i32
    %c0_i32_1 = arith.constant 0 : i32
    return %c0_i32, %c0_i32_0 : i32, i32
  }
  func.func @transform_5(%arg0: i32) -> (i32, i32) {
    %c0_i32 = arith.constant 0 : i32
    %c0_i32_0 = arith.constant 0 : i32
    return %arg0, %c0_i32 : i32, i32
  }
}

</mosaic_0001>

<llo_original>
// kernel: simple_nn_forward.1
$region0: #{simple_nn_forward.1}
  #allocation0 [shape = 'u32[]', space=smem, size = 0x4, offset = 0x4, fixed_abs, tag = 'smem constant byte address 0x4 - core index']
  #allocation1 [shape = 'u32[72,128]{1,0:T(1,128)}', space=vmem, size = 0x9000, scoped, tag = 'internal scratch']
  %s0 = inlined_call_operand.vmem [shape: f32[8,2], index: 0, kind: input, shape index: {}]
  %s1 = inlined_call_operand.vmem [shape: f32[2,128], index: 1, kind: input, shape index: {}]
  %s2 = inlined_call_operand.vmem [shape: f32[1,128], index: 2, kind: input, shape index: {}]
  %s3 = inlined_call_operand.hbm [shape: f32[128,128], index: 3, kind: input, shape index: {}]
  %s4 = inlined_call_operand.vmem [shape: f32[1,128], index: 4, kind: input, shape index: {}]
  %s5 = inlined_call_operand.vmem [shape: f32[8,128], index: 5, kind: output, shape index: {}]
  %s6 = sld [smem:[#allocation0]]
  $region34: #{simple_nn_forward.1} parent=0
    _
  %s8 = ssub.s32 1, %s6
  %s9 = scalar_select 0, %s8, %s6
  $region1: #{simple_nn_forward.1} parent=0
    #allocation2 [shape = 'u8[65536]{0}', space=vmem, size = 0x10000, scoped, tag = 'input window, operand 3, single buffered']
    #allocation3 [shape = 's32[1]{0}', space=sflag, size = 0x4, scoped, tag = 'scoped memory for simple_nn_forward.1']
    %10 = vsyncpa [#allocation3], 0
    // Predicated region
    $region2: #{simple_nn_forward.1} parent=1 // pred_check
      _
    $region3: #{simple_nn_forward.1} parent=1 // pred_check_branch
      %12 = sbr.rel (0) target = $region5
    $region4: #{simple_nn_forward.1} parent=1 // pred_region
      _
    $region5: #{simple_nn_forward.1} parent=1 // pred_fallthru
      _
    // Predicated region
    $region6: #{simple_nn_forward.1} parent=1 // pred_check
      _
    $region7: #{simple_nn_forward.1} parent=1 // pred_check_branch
      %14 = sbr.rel (0) target = $region9
    $region8: #{simple_nn_forward.1} parent=1 // pred_region
      _
    $region9: #{simple_nn_forward.1} parent=1 // pred_fallthru
      _
    // Predicated region
    $region10: #{simple_nn_forward.1} parent=1 // pred_check
      _
    $region11: #{simple_nn_forward.1} parent=1 // pred_check_branch
      %16 = sbr.rel (0) target = $region13
    $region12: #{simple_nn_forward.1} parent=1 // pred_region
      _
    $region13: #{simple_nn_forward.1} parent=1 // pred_fallthru
      _
    // Predicated region
    $region14: #{simple_nn_forward.1} parent=1 // pred_check
      _
    $region15: #{simple_nn_forward.1} parent=1 // pred_check_branch
      %18 = sbr.rel (0) target = $region17
    $region16: #{simple_nn_forward.1} parent=1 // pred_region
      %20 = vsyncadd [#allocation3], 0
      %s21 = sshll.u32 %s3, 4
      %s22 = int_to_ptr.hbm [resolvable:$true] %s21
      %s23 = sshll.u32 [#allocation2], 4
      %s24 = int_to_ptr.vmem [resolvable:$true] %s23
      %29 = dma.hbm_to_vmem [thread:$0]  %s22, 2048, %s24, [#allocation3], 128, 128, 8
    $region17: #{simple_nn_forward.1} parent=1 // pred_fallthru
      _
    // Predicated region
    $region18: #{simple_nn_forward.1} parent=1 // pred_check
      _
    $region19: #{simple_nn_forward.1} parent=1 // pred_check_branch
      %31 = sbr.rel (0) target = $region21
    $region20: #{simple_nn_forward.1} parent=1 // pred_region
      _
    $region21: #{simple_nn_forward.1} parent=1 // pred_fallthru
      _
    // Predicated region
    $region22: #{simple_nn_forward.1} parent=1 // pred_check
      _
    $region23: #{simple_nn_forward.1} parent=1 // pred_check_branch
      %33 = sbr.rel (0) target = $region25
    $region24: #{simple_nn_forward.1} parent=1 // pred_region
      %35 = dma.done [#allocation3], 2048
    $region25: #{simple_nn_forward.1} parent=1 // pred_fallthru
      _
    %v36 = vld [vmem:[%s0] sm:$0xff]
    %v37 = vld [vmem:[%s1] sm:$0x3]
    %39 = vset.pattern.permute.xlu0 0
    %40 = vperm.xlu0 %39, %v36
    %v41 = vpop.permute.xlu0 %40
    %v43 = vperm.slane %v37, 0
    %v44 = vmul.f32 %v41, %v43
    %45 = vset.pattern.permute.xlu0 1
    %46 = vperm.xlu0 %45, %v36
    %v47 = vpop.permute.xlu0 %46
    %v49 = vperm.slane %v37, 1
    %v50 = vmul.f32 %v47, %v49
    %v51 = vadd.f32 %v44, %v50
    %v52 = vld [vmem:[%s2] sm:$0x1]
    %v54 = vperm.slane %v52, 0
    %v56 = vadd.f32 %v51, %v54
    %v57 = vmax.f32 %v56, 0.0
    %v58 = vld [vmem:[#allocation2] sm:$0xff]
    %v59 = vld [vmem:[#allocation2 + $0x8] sm:$0xff]
    %v60 = vld [vmem:[#allocation2 + $0x10] sm:$0xff]
    %v61 = vld [vmem:[#allocation2 + $0x18] sm:$0xff]
    %v62 = vld [vmem:[#allocation2 + $0x20] sm:$0xff]
    %v63 = vld [vmem:[#allocation2 + $0x28] sm:$0xff]
    %v64 = vld [vmem:[#allocation2 + $0x30] sm:$0xff]
    %v65 = vld [vmem:[#allocation2 + $0x38] sm:$0xff]
    %v66 = vld [vmem:[#allocation2 + $0x40] sm:$0xff]
    %v67 = vld [vmem:[#allocation2 + $0x48] sm:$0xff]
    %v68 = vld [vmem:[#allocation2 + $0x50] sm:$0xff]
    %v69 = vld [vmem:[#allocation2 + $0x58] sm:$0xff]
    %v70 = vld [vmem:[#allocation2 + $0x60] sm:$0xff]
    %v71 = vld [vmem:[#allocation2 + $0x68] sm:$0xff]
    %v72 = vld [vmem:[#allocation2 + $0x70] sm:$0xff]
    %v73 = vld [vmem:[#allocation2 + $0x78] sm:$0xff]
    %v74 = vld [vmem:[%s4] sm:$0x1]
    %v76 = vperm.slane %v74, 0
    %78 = vmatpush.msra.mxu0 %v73
    %79 = vmatpush.msra.mxu0 %v72
    %80 = vmatpush.msra.mxu0 %v71
    %81 = vmatpush.msra.mxu0 %v70
    %82 = vmatpush.msra.mxu0 %v69
    %83 = vmatpush.msra.mxu0 %v68
    %84 = vmatpush.msra.mxu0 %v67
    %85 = vmatpush.msra.mxu0 %v66
    %86 = vmatpush.msra.mxu0 %v65
    %87 = vmatpush.msra.mxu0 %v64
    %88 = vmatpush.msra.mxu0 %v63
    %89 = vmatpush.msra.mxu0 %v62
    %90 = vmatpush.msra.mxu0 %v61
    %91 = vmatpush.msra.mxu0 %v60
    %92 = vmatpush.msra.mxu0 %v59
    %93 = vmatpush.msra.mxu0 %v58
    %94 = vmatmul.f32.gmra.mxu0 %v57
    %v95 = vpop.f32.mrf.mxu0
    %v96 = vadd.f32 %v76, %v95
    %97 = vdwg.mxu0
    %98 = vst [vmem:[%s5] sm:$0xff] %v96
    // Predicated region
    $region26: #{simple_nn_forward.1} parent=1 // pred_check
      _
    $region27: #{simple_nn_forward.1} parent=1 // pred_check_branch
      %100 = sbr.rel (0) target = $region29
    $region28: #{simple_nn_forward.1} parent=1 // pred_region
      _
    $region29: #{simple_nn_forward.1} parent=1 // pred_fallthru
      _
    // Predicated region
    $region30: #{simple_nn_forward.1} parent=1 // pred_check
      _
    $region31: #{simple_nn_forward.1} parent=1 // pred_check_branch
      %102 = sbr.rel (0) target = $region33
    $region32: #{simple_nn_forward.1} parent=1 // pred_region
      _
    $region33: #{simple_nn_forward.1} parent=1 // pred_fallthru
      _
    %103 = vsyncpa [#allocation3], 1

</llo_original>
